<compile_context>
chip_gen: v7x
topology: tpu7x:2x2x1
jax: 0.10.0
libtpu: 0.0.40
codegen_flags: <defaults>
</compile_context>

<pallas_src>
import jax
import jax.numpy as jnp
from jax.experimental import pallas as pl
from jax.experimental.pallas import tpu as pltpu

_BIG = 1e30  # "infinite" squared distance for padded rows/columns.


def _round_up(x, m):
    return (x + m - 1) // m * m


def _chamfer_conf_kernel(lhs_ref, rhs_ref, dist1_ref, dist2_ref,
                         dmin1_scr, dmin2_scr, conf2_scr):
    # grid = (B, n_tiles, m_tiles); m is the innermost axis.
    n_idx = pl.program_id(1)
    m_idx = pl.program_id(2)
    n_last = pl.num_programs(1) - 1
    m_last = pl.num_programs(2) - 1

    lhs = lhs_ref[0]                                   # (tn, 8)
    rhs = rhs_ref[0]                                   # (8, tm)
    tm = rhs.shape[1]

    # Pairwise squared-distance tile straight off the MXU (K=8 is ~free):
    # d = ||p1||^2 + ||p2||^2 - 2*p1.p2 via the augmented operands.
    d = jnp.dot(lhs, rhs, preferred_element_type=jnp.float32)   # (tn, tm)

    conf_col = lhs[:, 5:6]                             # (tn, 1) set-1 conf

    # ---- dist1: running min over m-tiles for this n-tile ----------------
    tile_min1 = jnp.min(d, axis=1, keepdims=True)      # (tn, 1)

    @pl.when(m_idx == 0)
    def _():
        dmin1_scr[...] = tile_min1

    @pl.when(m_idx != 0)
    def _():
        dmin1_scr[...] = jnp.minimum(dmin1_scr[...], tile_min1)

    @pl.when(m_idx == m_last)
    def _():
        # Clamp the *reduced* vector (cancellation guard), weight by conf,
        # one small XLU transpose per n-tile -> lane-dense (1, tn) store.
        dist1_ref[0] = (conf_col * jnp.maximum(dmin1_scr[...], 0.0)).T

    # ---- dist2: running (min, conf-of-min) over n-tiles ------------------
    tile_min2 = jnp.min(d, axis=0, keepdims=True)      # (1, tm)
    # conf of the matched set-1 point (max-conf tie-break on exact ties),
    # computed while d's vregs are hot.
    tile_conf2 = jnp.max(jnp.where(d == tile_min2, conf_col, -jnp.inf),
                         axis=0, keepdims=True)        # (1, tm)

    off = pl.multiple_of(m_idx * tm, tm)

    @pl.when(n_idx == 0)
    def _():
        dmin2_scr[:, pl.ds(off, tm)] = tile_min2
        conf2_scr[:, pl.ds(off, tm)] = tile_conf2

    @pl.when(n_idx != 0)
    def _():
        run_min = dmin2_scr[:, pl.ds(off, tm)]
        run_conf = conf2_scr[:, pl.ds(off, tm)]
        better = tile_min2 < run_min                   # earlier tile wins ties
        dmin2_scr[:, pl.ds(off, tm)] = jnp.where(better, tile_min2, run_min)
        conf2_scr[:, pl.ds(off, tm)] = jnp.where(better, tile_conf2, run_conf)

    @pl.when(jnp.logical_and(n_idx == n_last, m_idx == m_last))
    def _():
        # All (1, Mp) running slices are complete: single lane-dense write
        # per batch (clamp only the reduced vector).
        dist2_ref[0] = conf2_scr[...] * jnp.maximum(dmin2_scr[...], 0.0)


def chamfer_distance_confidence(input1, input2, *, tile_n=None, tile_m=None):
    """input1: (B, N, 4) [x,y,z,conf], input2: (B, M, 3) [x,y,z].

    Returns (dist1, dist2) with shapes (B, N), (B, M) in float32, matching the
    PyTorch ChamferDistanceConfidence.forward output.
    """
    B, N, C1 = input1.shape
    B2, M, C2 = input2.shape
    assert B == B2 and C1 == 4 and C2 == 3

    input1 = input1.astype(jnp.float32)
    input2 = input2.astype(jnp.float32)

    p1 = input1[:, :, :3]                                   # (B, N, 3)
    conf = input1[:, :, 3]                                  # (B, N)
    p2 = input2                                             # (B, M, 3)

    # Center both clouds on a common per-batch point: distances are
    # translation invariant, and this tames cancellation in the matmul
    # identity without any in-kernel cost.
    centre = 0.5 * (jnp.mean(p1, axis=1, keepdims=True)
                    + jnp.mean(p2, axis=1, keepdims=True))  # (B, 1, 3)
    p1 = p1 - centre
    p2 = p2 - centre

    # ---- tile sizes (tiled running-min path for large N*M) --------------
    Np0 = _round_up(N, 8)      # sublane granule
    Mp0 = _round_up(M, 128)    # lane granule
    big = 4 * Np0 * Mp0 > 4 * 2**20     # full d tile (+temps) would strain VMEM
    if tile_n is None:
        tile_n = 256 if big else Np0
    if tile_m is None:
        tile_m = 512 if big else Mp0    # multiple of 256 -> full MXU columns
    # Multi-n-tile => tn is a multiple of 128 (dist1 stores are lane-dense);
    # single tile => tn equals the full (8-aligned) extent.
    tn = min(_round_up(tile_n, 128), Np0)
    tm = min(_round_up(tile_m, 128), Mp0)
    Np = _round_up(N, tn)
    Mp = _round_up(M, tm)
    n_tiles = Np // tn
    m_tiles = Mp // tm

    # ---- build augmented operands (all layout plumbing stays in XLA) ----
    #   LHS[b] = [-2*p1 | ||p1||^2 | 1 | conf | 0 0]   -> (Np, 8)
    #   RHS[b] = [p2^T ; 1 ; ||p2||^2 ; 0 ; 0 ; 0]     -> (8,  Mp)
    sq1 = jnp.sum(p1 * p1, axis=-1)                         # (B, N)
    p1p = jnp.pad(p1, ((0, 0), (0, Np - N), (0, 0)))
    sq1p = jnp.pad(sq1, ((0, 0), (0, Np - N)), constant_values=_BIG)
    confp = jnp.pad(conf, ((0, 0), (0, Np - N)))            # padded conf = 0
    ones_n = jnp.ones((B, Np, 1), jnp.float32)

    lhs = jnp.concatenate(
        [-2.0 * p1p,                                        # cols 0..2
         sq1p[..., None],                                   # col 3: ||p1||^2
         ones_n,                                            # col 4: 1
         confp[..., None],                                  # col 5: conf
         jnp.zeros((B, Np, 2), jnp.float32)],               # cols 6..7
        axis=-1)                                            # (B, Np, 8)

    sq2 = jnp.sum(p2 * p2, axis=-1)                         # (B, M)
    p2p = jnp.pad(p2, ((0, 0), (0, Mp - M), (0, 0)))
    sq2p = jnp.pad(sq2, ((0, 0), (0, Mp - M)), constant_values=_BIG)
    ones_m = jnp.ones((B, 1, Mp), jnp.float32)

    rhs = jnp.concatenate(
        [jnp.transpose(p2p, (0, 2, 1)),                     # rows 0..2 (lane-dense)
         ones_m,                                            # row 3: 1
         sq2p[:, None, :],                                  # row 4: ||p2||^2
         jnp.zeros((B, 3, Mp), jnp.float32)],               # rows 5..7
        axis=1)                                             # (B, 8, Mp)

    # ---- generation-aware VMEM limit (~48 MiB v7x, ~96 MiB v5e/v6e) -----
    try:
        vmem_cap = pltpu.get_tpu_info().vmem_capacity_bytes
    except Exception:
        vmem_cap = 64 * 2**20           # conservative: v7x per-core VMEM
    vmem_limit = int(vmem_cap * 3 // 4)

    d1, d2 = pl.pallas_call(
        _chamfer_conf_kernel,
        out_shape=(jax.ShapeDtypeStruct((B, 1, Np), jnp.float32),
                   jax.ShapeDtypeStruct((B, 1, Mp), jnp.float32)),
        grid_spec=pltpu.PrefetchScalarGridSpec(
            num_scalar_prefetch=0,
            grid=(B, n_tiles, m_tiles),
            in_specs=[pl.BlockSpec((1, tn, 8), lambda b, n, m: (b, n, 0)),
                      pl.BlockSpec((1, 8, tm), lambda b, n, m: (b, 0, m))],
            out_specs=[pl.BlockSpec((1, 1, tn), lambda b, n, m: (b, 0, n)),
                       pl.BlockSpec((1, 1, Mp), lambda b, n, m: (b, 0, 0))],
            scratch_shapes=[pltpu.VMEM((tn, 1), jnp.float32),   # dist1 run-min
                            pltpu.VMEM((1, Mp), jnp.float32),   # dist2 run-min
                            pltpu.VMEM((1, Mp), jnp.float32)],  # dist2 run-conf
        ),
        compiler_params=pltpu.CompilerParams(
            dimension_semantics=("parallel", "arbitrary", "arbitrary"),
            vmem_limit_bytes=vmem_limit),
    )(lhs, rhs)

    return d1[:, 0, :N], d2[:, 0, :M]


def _reference(input1, input2):
    """Pure-JAX reference (direct pairwise differences)."""
    p1 = input1[..., :3]
    conf = input1[..., 3]
    p2 = input2
    d = jnp.sum((p1[:, :, None, :] - p2[:, None, :, :]) ** 2, axis=-1)  # (B,N,M)
    dmin1 = jnp.min(d, axis=2)
    dmin2 = jnp.min(d, axis=1)
    idx2 = jnp.argmin(d, axis=1)
    conf_nn = jnp.take_along_axis(conf, idx2, axis=1)
    return conf * dmin1, conf_nn * dmin2


if __name__ == "__main__":
    key = jax.random.PRNGKey(0)
    k1, k2, k3 = jax.random.split(key, 3)

    # --- test 1: single-tile path (small clouds) -------------------------
    B, N, M = 2, 128, 96
    xyz1 = jax.random.uniform(k1, (B, N, 3), jnp.float32, minval=-1.0, maxval=1.0)
    conf1 = jax.random.uniform(k2, (B, N, 1), jnp.float32, minval=0.0, maxval=1.0)
    input1 = jnp.concatenate([xyz1, conf1], axis=-1)          # (B, N, 4)
    input2 = jax.random.uniform(k3, (B, M, 3), jnp.float32, minval=-1.0, maxval=1.0)

    dist1, dist2 = chamfer_distance_confidence(input1, input2)
    jax.block_until_ready((dist1, dist2))

    ref1, ref2 = _reference(input1, input2)
    assert dist1.shape == (B, N) and dist2.shape == (B, M)
    assert jnp.allclose(dist1, ref1, rtol=1e-4, atol=1e-4)
    assert jnp.allclose(dist2, ref2, rtol=1e-4, atol=1e-4)

    # --- test 2: tiled running-min path (multiple n- and m-tiles) --------
    # Constant confidence so the check is insensitive to argmin flips on
    # numerically-near distance ties between the kernel and the reference.
    Bt, Nt, Mt = 1, 200, 300
    xyz1b = jax.random.uniform(k1, (Bt, Nt, 3), jnp.float32, minval=-1.0, maxval=1.0)
    conf1b = jnp.full((Bt, Nt, 1), 0.5, jnp.float32)
    in1b = jnp.concatenate([xyz1b, conf1b], axis=-1)
    in2b = jax.random.uniform(k3, (Bt, Mt, 3), jnp.float32, minval=-1.0, maxval=1.0)

    t1, t2 = chamfer_distance_confidence(in1b, in2b, tile_n=128, tile_m=128)
    jax.block_until_ready((t1, t2))

    r1, r2 = _reference(in1b, in2b)
    assert t1.shape == (Bt, Nt) and t2.shape == (Bt, Mt)
    assert jnp.allclose(t1, r1, rtol=1e-4, atol=1e-4)
    assert jnp.allclose(t2, r2, rtol=1e-4, atol=1e-4)

    print("KERNEL_OK")
</pallas_src>

<mosaic_0001>
module attributes {stable_mosaic.version = 11 : i64} {
  func.func @_chamfer_conf_kernel(%arg0: i32, %arg1: i32, %arg2: i32, %arg3: memref<1x128x8xf32, #tpu.memory_space<vmem>>, %arg4: memref<1x8x128xf32, #tpu.memory_space<vmem>>, %arg5: memref<1x1x128xf32, #tpu.memory_space<vmem>>, %arg6: memref<1x1x128xf32, #tpu.memory_space<vmem>>, %arg7: memref<128x1xf32, #tpu.memory_space<vmem>>, %arg8: memref<1x128xf32, #tpu.memory_space<vmem>>, %arg9: memref<1x128xf32, #tpu.memory_space<vmem>>) attributes {dimension_semantics = [#tpu.dimension_semantics<parallel>, #tpu.dimension_semantics<arbitrary>, #tpu.dimension_semantics<arbitrary>], iteration_bounds = array<i64: 2, 1, 1>, scalar_prefetch = 0 : i64, scratch_operands = 3 : i64, tpu.core_type = #tpu.core_type<tc>, window_params = [{transform_indices = @transform_0, window_bounds = array<i64: 1, 128, 8>}, {transform_indices = @transform_1, window_bounds = array<i64: 1, 8, 128>}, {transform_indices = @transform_2, window_bounds = array<i64: 1, 1, 128>}, {transform_indices = @transform_3, window_bounds = array<i64: 1, 1, 128>}]} {
    %c0 = arith.constant 0 : index
    %c0_0 = arith.constant 0 : index
    %c0_1 = arith.constant 0 : index
    %0 = vector.load %arg3[%c0, %c0_0, %c0_1] : memref<1x128x8xf32, #tpu.memory_space<vmem>>, vector<1x128x8xf32>
    %1 = vector.shape_cast %0 : vector<1x128x8xf32> to vector<128x8xf32>
    %c0_2 = arith.constant 0 : index
    %c0_3 = arith.constant 0 : index
    %c0_4 = arith.constant 0 : index
    %2 = vector.load %arg4[%c0_2, %c0_3, %c0_4] : memref<1x8x128xf32, #tpu.memory_space<vmem>>, vector<1x8x128xf32>
    %3 = vector.shape_cast %2 : vector<1x8x128xf32> to vector<8x128xf32>
    %cst = arith.constant dense<0.000000e+00> : vector<128x128xf32>
    %4 = tpu.matmul %1, %3, %cst {dimension_numbers = #tpu.dot_dimension_numbers<[1], [0], [0], [1], [0, 0, 1, 1], [], []>} : vector<128x8xf32>, vector<8x128xf32>, vector<128x128xf32> -> vector<128x128xf32>
    %5 = vector.extract_strided_slice %1 {offsets = [0, 5], sizes = [128, 1], strides = [1, 1]} : vector<128x8xf32> to vector<128x1xf32>
    %cst_5 = arith.constant dense<0x7F800000> : vector<128xf32>
    %6 = vector.multi_reduction <minimumf>, %4, %cst_5 [1] : vector<128x128xf32> to vector<128xf32>
    %7 = vector.shape_cast %6 : vector<128xf32> to vector<128x1xf32>
    %c0_i32 = arith.constant 0 : i32
    %8 = arith.cmpi eq, %arg2, %c0_i32 : i32
    %9 = arith.extui %8 : i1 to i32
    %c0_i32_6 = arith.constant 0 : i32
    %10 = arith.cmpi ne, %9, %c0_i32_6 : i32
    scf.if %10 {
      %c0_21 = arith.constant 0 : index
      %c0_22 = arith.constant 0 : index
      %40 = vector.load %arg7[%c0_21, %c0_22] : memref<128x1xf32, #tpu.memory_space<vmem>>, vector<128x1xf32>
      tpu.vector_store %arg7[%c0_21, %c0_22], %7 {strides = array<i32>} : memref<128x1xf32, #tpu.memory_space<vmem>>, vector<128x1xf32>,
    } else {
    }
    %c0_i32_7 = arith.constant 0 : i32
    %11 = arith.cmpi ne, %arg2, %c0_i32_7 : i32
    %12 = arith.extui %11 : i1 to i32
    %c0_i32_8 = arith.constant 0 : i32
    %13 = arith.cmpi ne, %12, %c0_i32_8 : i32
    scf.if %13 {
      %c0_21 = arith.constant 0 : index
      %c0_22 = arith.constant 0 : index
      %40 = vector.load %arg7[%c0_21, %c0_22] : memref<128x1xf32, #tpu.memory_space<vmem>>, vector<128x1xf32>
      %41 = arith.minimumf %40, %7 : vector<128x1xf32>
      %c0_23 = arith.constant 0 : index
      %c0_24 = arith.constant 0 : index
      %42 = vector.load %arg7[%c0_23, %c0_24] : memref<128x1xf32, #tpu.memory_space<vmem>>, vector<128x1xf32>
      tpu.vector_store %arg7[%c0_23, %c0_24], %41 {strides = array<i32>} : memref<128x1xf32, #tpu.memory_space<vmem>>, vector<128x1xf32>,
    } else {
    }
    %c0_i32_9 = arith.constant 0 : i32
    %14 = arith.cmpi eq, %arg2, %c0_i32_9 : i32
    %15 = arith.extui %14 : i1 to i32
    %c0_i32_10 = arith.constant 0 : i32
    %16 = arith.cmpi ne, %15, %c0_i32_10 : i32
    scf.if %16 {
      %c0_21 = arith.constant 0 : index
      %c0_22 = arith.constant 0 : index
      %40 = vector.load %arg7[%c0_21, %c0_22] : memref<128x1xf32, #tpu.memory_space<vmem>>, vector<128x1xf32>
      %cst_23 = arith.constant 0.000000e+00 : f32
      %41 = vector.broadcast %cst_23 : f32 to vector<128x1xf32>
      %42 = arith.maximumf %40, %41 : vector<128x1xf32>
      %43 = arith.mulf %5, %42 : vector<128x1xf32>
      %44 = tpu.transpose %43, [1, 0] : vector<128x1xf32> -> vector<1x128xf32>
      %c0_24 = arith.constant 0 : index
      %c0_25 = arith.constant 0 : index
      %c0_26 = arith.constant 0 : index
      %45 = vector.load %arg5[%c0_24, %c0_25, %c0_26] : memref<1x1x128xf32, #tpu.memory_space<vmem>>, vector<1x1x128xf32>
      %46 = vector.shape_cast %45 : vector<1x1x128xf32> to vector<1x128xf32>
      %47 = vector.shape_cast %44 : vector<1x128xf32> to vector<1x1x128xf32>
      tpu.vector_store %arg5[%c0_24, %c0_25, %c0_26], %47 {strides = array<i32>} : memref<1x1x128xf32, #tpu.memory_space<vmem>>, vector<1x1x128xf32>,
    } else {
    }
    %cst_11 = arith.constant dense<0x7F800000> : vector<128xf32>
    %17 = vector.multi_reduction <minimumf>, %4, %cst_11 [0] : vector<128x128xf32> to vector<128xf32>
    %18 = vector.shape_cast %17 : vector<128xf32> to vector<1x128xf32>
    %19 = vector.broadcast %18 : vector<1x128xf32> to vector<128x128xf32>
    %20 = arith.cmpf oeq, %4, %19 : vector<128x128xf32>
    %cst_12 = arith.constant 0xFF800000 : f32
    %21 = vector.shape_cast %5 : vector<128x1xf32> to vector<128x1xf32>
    %22 = vector.broadcast %21 : vector<128x1xf32> to vector<128x128xf32>
    %23 = vector.broadcast %cst_12 : f32 to vector<128x128xf32>
    %24 = arith.select %20, %22, %23 : vector<128x128xi1>, vector<128x128xf32>
    %cst_13 = arith.constant dense<0xFF800000> : vector<128xf32>
    %25 = vector.multi_reduction <maximumf>, %24, %cst_13 [0] : vector<128x128xf32> to vector<128xf32>
    %26 = vector.shape_cast %25 : vector<128xf32> to vector<1x128xf32>
    %c128_i32 = arith.constant 128 : i32
    %27 = arith.muli %arg2, %c128_i32 : i32
    %28 = tpu.assume_multiple %27, 128 : i32
    %c0_i32_14 = arith.constant 0 : i32
    %29 = arith.cmpi eq, %arg1, %c0_i32_14 : i32
    %30 = arith.extui %29 : i1 to i32
    %c0_i32_15 = arith.constant 0 : i32
    %31 = arith.cmpi ne, %30, %c0_i32_15 : i32
    scf.if %31 {
      %c0_21 = arith.constant 0 : index
      %40 = arith.index_cast %28 : i32 to index
      %41 = vector.load %arg8[%c0_21, %40] : memref<1x128xf32, #tpu.memory_space<vmem>>, vector<1x128xf32>
      tpu.vector_store %arg8[%c0_21, %40], %18 {strides = array<i32>} : memref<1x128xf32, #tpu.memory_space<vmem>>, vector<1x128xf32>,
      %c0_22 = arith.constant 0 : index
      %42 = arith.index_cast %28 : i32 to index
      %43 = vector.load %arg9[%c0_22, %42] : memref<1x128xf32, #tpu.memory_space<vmem>>, vector<1x128xf32>
      tpu.vector_store %arg9[%c0_22, %42], %26 {strides = array<i32>} : memref<1x128xf32, #tpu.memory_space<vmem>>, vector<1x128xf32>,
    } else {
    }
    %c0_i32_16 = arith.constant 0 : i32
    %32 = arith.cmpi ne, %arg1, %c0_i32_16 : i32
    %33 = arith.extui %32 : i1 to i32
    %c0_i32_17 = arith.constant 0 : i32
    %34 = arith.cmpi ne, %33, %c0_i32_17 : i32
    scf.if %34 {
      %c0_21 = arith.constant 0 : index
      %40 = arith.index_cast %28 : i32 to index
      %41 = vector.load %arg8[%c0_21, %40] : memref<1x128xf32, #tpu.memory_space<vmem>>, vector<1x128xf32>
      %c0_22 = arith.constant 0 : index
      %42 = arith.index_cast %28 : i32 to index
      %43 = vector.load %arg9[%c0_22, %42] : memref<1x128xf32, #tpu.memory_space<vmem>>, vector<1x128xf32>
      %44 = arith.cmpf olt, %18, %41 : vector<1x128xf32>
      %45 = arith.select %44, %18, %41 : vector<1x128xi1>, vector<1x128xf32>
      %c0_23 = arith.constant 0 : index
      %46 = arith.index_cast %28 : i32 to index
      %47 = vector.load %arg8[%c0_23, %46] : memref<1x128xf32, #tpu.memory_space<vmem>>, vector<1x128xf32>
      tpu.vector_store %arg8[%c0_23, %46], %45 {strides = array<i32>} : memref<1x128xf32, #tpu.memory_space<vmem>>, vector<1x128xf32>,
      %48 = arith.select %44, %26, %43 : vector<1x128xi1>, vector<1x128xf32>
      %c0_24 = arith.constant 0 : index
      %49 = arith.index_cast %28 : i32 to index
      %50 = vector.load %arg9[%c0_24, %49] : memref<1x128xf32, #tpu.memory_space<vmem>>, vector<1x128xf32>
      tpu.vector_store %arg9[%c0_24, %49], %48 {strides = array<i32>} : memref<1x128xf32, #tpu.memory_space<vmem>>, vector<1x128xf32>,
    } else {
    }
    %c0_i32_18 = arith.constant 0 : i32
    %35 = arith.cmpi eq, %arg1, %c0_i32_18 : i32
    %c0_i32_19 = arith.constant 0 : i32
    %36 = arith.cmpi eq, %arg2, %c0_i32_19 : i32
    %37 = arith.andi %35, %36 : i1
    %38 = arith.extui %37 : i1 to i32
    %c0_i32_20 = arith.constant 0 : i32
    %39 = arith.cmpi ne, %38, %c0_i32_20 : i32
    scf.if %39 {
      %c0_21 = arith.constant 0 : index
      %c0_22 = arith.constant 0 : index
      %40 = vector.load %arg9[%c0_21, %c0_22] : memref<1x128xf32, #tpu.memory_space<vmem>>, vector<1x128xf32>
      %c0_23 = arith.constant 0 : index
      %c0_24 = arith.constant 0 : index
      %41 = vector.load %arg8[%c0_23, %c0_24] : memref<1x128xf32, #tpu.memory_space<vmem>>, vector<1x128xf32>
      %cst_25 = arith.constant 0.000000e+00 : f32
      %42 = vector.broadcast %cst_25 : f32 to vector<1x128xf32>
      %43 = arith.maximumf %41, %42 : vector<1x128xf32>
      %44 = arith.mulf %40, %43 : vector<1x128xf32>
      %c0_26 = arith.constant 0 : index
      %c0_27 = arith.constant 0 : index
      %c0_28 = arith.constant 0 : index
      %45 = vector.load %arg6[%c0_26, %c0_27, %c0_28] : memref<1x1x128xf32, #tpu.memory_space<vmem>>, vector<1x1x128xf32>
      %46 = vector.shape_cast %45 : vector<1x1x128xf32> to vector<1x128xf32>
      %47 = vector.shape_cast %44 : vector<1x128xf32> to vector<1x1x128xf32>
      tpu.vector_store %arg6[%c0_26, %c0_27, %c0_28], %47 {strides = array<i32>} : memref<1x1x128xf32, #tpu.memory_space<vmem>>, vector<1x1x128xf32>,
    } else {
    }
    return
  }
  func.func @transform_0(%arg0: i32, %arg1: i32, %arg2: i32) -> (i32, i32, i32) {
    %c0_i32 = arith.constant 0 : i32
    %c0_i32_0 = arith.constant 0 : i32
    return %arg0, %arg1, %c0_i32 : i32, i32, i32
  }
  func.func @transform_1(%arg0: i32, %arg1: i32, %arg2: i32) -> (i32, i32, i32) {
    %c0_i32 = arith.constant 0 : i32
    %c0_i32_0 = arith.constant 0 : i32
    return %arg0, %c0_i32, %arg2 : i32, i32, i32
  }
  func.func @transform_2(%arg0: i32, %arg1: i32, %arg2: i32) -> (i32, i32, i32) {
    %c0_i32 = arith.constant 0 : i32
    %c0_i32_0 = arith.constant 0 : i32
    return %arg0, %c0_i32, %arg1 : i32, i32, i32
  }
  func.func @transform_3(%arg0: i32, %arg1: i32, %arg2: i32) -> (i32, i32, i32) {
    %c0_i32 = arith.constant 0 : i32
    %c0_i32_0 = arith.constant 0 : i32
    %c0_i32_1 = arith.constant 0 : i32
    return %arg0, %c0_i32, %c0_i32_0 : i32, i32, i32
  }
}

</mosaic_0001>

<llo_original>
// kernel: tpu_custom_call.1
$region0: #{tpu_custom_call.1}
  #allocation0 [shape = 'u32[]', space=smem, size = 0x4, offset = 0x4, fixed_abs, tag = 'smem constant byte address 0x4 - core index']
  #allocation1 [shape = 'u32[144,128]{1,0:T(1,128)}', space=vmem, size = 0x12000, scoped, tag = 'internal scratch']
  #allocation2 [shape = 'f32[128,1]{1,0:T(8,128)}', space=vmem, size = 0x10000, scoped, tag = 'scratch operand']
  #allocation3 [shape = 'f32[1,128]{1,0:T(1,128)}', space=vmem, size = 0x200, scoped, tag = 'scratch operand']
  #allocation4 [shape = 'f32[1,128]{1,0:T(1,128)}', space=vmem, size = 0x200, scoped, tag = 'scratch operand']
  %s0 = inlined_call_operand.vmem [shape: f32[2,128,8], index: 0, kind: input, shape index: {}]
  %s1 = inlined_call_operand.vmem [shape: f32[2,8,128], index: 1, kind: input, shape index: {}]
  %s2 = inlined_call_operand.hbm [shape: f32[2,1,128], index: 2, kind: output, shape index: {0}]
  %s3 = inlined_call_operand.hbm [shape: f32[2,1,128], index: 3, kind: output, shape index: {1}]
  %4 = xla_tuple %s2, %s3
  %s5 = sld [smem:[#allocation0]]
  $region73: #{tpu_custom_call.1} parent=0
    _
  %s7 = ssub.s32 1, %s5
  %s8 = scalar_select 0, %s7, %s5
  $region1: #{tpu_custom_call.1} parent=0
    #allocation5 [shape = 'u8[1024]{0}', space=vmem, size = 0x400, scoped, tag = 'output window, operand 0']
    #allocation6 [shape = 's32[2]{0}', space=sflag, size = 0x8, scoped, tag = 'scoped memory for tpu_custom_call.1']
    #allocation7 [shape = 'u8[1024]{0}', space=vmem, size = 0x400, scoped, tag = 'output window, operand 1']
    #allocation8 [shape = 's32[2]{0}', space=sflag, size = 0x8, scoped, tag = 'scoped memory for tpu_custom_call.1']
    %9 = vsyncpa [#allocation6], 0
    %s10 = scalar_lea.sflag [#allocation6], 1
    %11 = vsyncpa %s10, 0
    %12 = vsyncpa [#allocation8], 0
    %s13 = scalar_lea.sflag [#allocation8], 1
    %14 = vsyncpa %s13, 0
    loop: start=0, step=1, limit=4
    $region2: #{tpu_custom_call.1} parent=1 // loop_pre_header
      _
    $region3: #{tpu_custom_call.1} parent=1 // loop_header
      %s16 = sphi 0, %s20
      %p17 = scmp.ge.s32.totalorder %s16, 4
      %s23 = sphi 0, %s42
      %s24 = sphi 0, %s38
      %s25 = sphi 0, %s34
      %s26 = sphi 0, %s23
      %s27 = sphi 0, %s24
      %s28 = sphi 0, %s25
      %s29 = sphi 0, %s26
      %s30 = sphi 0, %s27
      %s31 = sphi 0, %s28
      %s47 = sphi 0, %s49
      %s50 = sphi 0, %s47
      %s51 = sphi 0, %s50
      %s67 = sphi 0, %s51
      %s75 = sphi 0, %s77
      %s78 = sphi 0, %s75
      %s79 = sphi 0, %s78
      %s95 = sphi 0, %s79
      %s103 = sphi 0, %s105
      %s106 = sphi 0, %s103
      %s107 = sphi 0, %s106
      %s123 = sphi 0, %s107
      %s129 = sphi 0, %s131
      %s132 = sphi 0, %s129
      %s133 = sphi 0, %s132
      %s149 = sphi 0, %s133
    $region4: #{tpu_custom_call.1} parent=1 // loop_header_branch
      %19 = sbr.rel (%p17) target = $region8
    $region5: #{tpu_custom_call.1} parent=1 // loop_body
      %s21 = ssub.s32 %s16, 1
      %s22 = ssub.s32 %s16, 2
      %s32 = sadd.s32 1, %s25
      %p33 = scmp.ge.s32.totalorder %s32, 1
      %s34 = scalar_select %p33, 0, %s32
      %s35 = sadd.s32 1, %s24
      %s36 = scalar_select %p33, %s35, %s24
      %p37 = scmp.ge.s32.totalorder %s36, 1
      %s38 = scalar_select %p37, 0, %s36
      %s39 = sadd.s32 1, %s23
      %s40 = scalar_select %p37, %s39, %s23
      %p41 = scmp.ge.s32.totalorder %s40, 2
      %s42 = scalar_select %p41, 0, %s40
      %s43 = ssub.s32 %s23, %s42
      %s44 = ssub.s32 %s24, %s38
      %s45 = sor.u32 %s43, %s44
      %p46 = scmp.eq.s32.totalorder %s45, 0
      %s48 = sadd.s32 %s47, 1
      %s49 = scalar_select %p46, %s47, %s48
      %p52 = pneg %p46
      %p53 = scmp.eq.s32.totalorder %s16, 1
      %p54 = por %p52, %p53
      %p55 = scmp.ne.s32.totalorder %s47, %s50
      %p56 = scmp.eq.s32.totalorder %s16, 0
      %p57 = por %p55, %p56
      %p58 = scmp.ne.s32.totalorder %s47, %s50
      %p59 = scmp.eq.s32.totalorder %s21, 1
      %p60 = por %p58, %p59
      %p61 = scmp.ne.s32.totalorder %s50, %s51
      %p62 = scmp.eq.s32.totalorder %s21, 0
      %p63 = por %p61, %p62
      %p64 = scmp.ne.s32.totalorder %s50, %s51
      %p65 = scmp.eq.s32.totalorder %s22, 1
      %p66 = por %p64, %p65
      %p68 = scmp.ne.s32.totalorder %s51, %s67
      %p69 = scmp.eq.s32.totalorder %s22, 0
      %p70 = por %p68, %p69
      %s71 = ssub.s32 %s23, %s42
      %s72 = ssub.s32 %s25, %s34
      %s73 = sor.u32 %s71, %s72
      %p74 = scmp.eq.s32.totalorder %s73, 0
      %s76 = sadd.s32 %s75, 1
      %s77 = scalar_select %p74, %s75, %s76
      %p80 = pneg %p74
      %p81 = scmp.eq.s32.totalorder %s16, 1
      %p82 = por %p80, %p81
      %p83 = scmp.ne.s32.totalorder %s75, %s78
      %p84 = scmp.eq.s32.totalorder %s16, 0
      %p85 = por %p83, %p84
      %p86 = scmp.ne.s32.totalorder %s75, %s78
      %p87 = scmp.eq.s32.totalorder %s21, 1
      %p88 = por %p86, %p87
      %p89 = scmp.ne.s32.totalorder %s78, %s79
      %p90 = scmp.eq.s32.totalorder %s21, 0
      %p91 = por %p89, %p90
      %p92 = scmp.ne.s32.totalorder %s78, %s79
      %p93 = scmp.eq.s32.totalorder %s22, 1
      %p94 = por %p92, %p93
      %p96 = scmp.ne.s32.totalorder %s79, %s95
      %p97 = scmp.eq.s32.totalorder %s22, 0
      %p98 = por %p96, %p97
      %s99 = ssub.s32 %s23, %s42
      %s100 = ssub.s32 %s24, %s38
      %s101 = sor.u32 %s99, %s100
      %p102 = scmp.eq.s32.totalorder %s101, 0
      %s104 = sadd.s32 %s103, 1
      %s105 = scalar_select %p102, %s103, %s104
      %p108 = pneg %p102
      %p109 = scmp.eq.s32.totalorder %s16, 1
      %p110 = por %p108, %p109
      %p111 = scmp.ne.s32.totalorder %s103, %s106
      %p112 = scmp.eq.s32.totalorder %s16, 0
      %p113 = por %p111, %p112
      %p114 = scmp.ne.s32.totalorder %s103, %s106
      %p115 = scmp.eq.s32.totalorder %s21, 1
      %p116 = por %p114, %p115
      %p117 = scmp.ne.s32.totalorder %s106, %s107
      %p118 = scmp.eq.s32.totalorder %s21, 0
      %p119 = por %p117, %p118
      %p120 = scmp.ne.s32.totalorder %s106, %s107
      %p121 = scmp.eq.s32.totalorder %s22, 1
      %p122 = por %p120, %p121
      %p124 = scmp.ne.s32.totalorder %s107, %s123
      %p125 = scmp.eq.s32.totalorder %s22, 0
      %p126 = por %p124, %p125
      %s127 = ssub.s32 %s23, %s42
      %p128 = scmp.eq.s32.totalorder %s127, 0
      %s130 = sadd.s32 %s129, 1
      %s131 = scalar_select %p128, %s129, %s130
      %p134 = pneg %p128
      %p135 = scmp.eq.s32.totalorder %s16, 1
      %p136 = por %p134, %p135
      %p137 = scmp.ne.s32.totalorder %s129, %s132
      %p138 = scmp.eq.s32.totalorder %s16, 0
      %p139 = por %p137, %p138
      %p140 = scmp.ne.s32.totalorder %s129, %s132
      %p141 = scmp.eq.s32.totalorder %s21, 1
      %p142 = por %p140, %p141
      %p143 = scmp.ne.s32.totalorder %s132, %s133
      %p144 = scmp.eq.s32.totalorder %s21, 0
      %p145 = por %p143, %p144
      %p146 = scmp.ne.s32.totalorder %s132, %s133
      %p147 = scmp.eq.s32.totalorder %s22, 1
      %p148 = por %p146, %p147
      %p150 = scmp.ne.s32.totalorder %s133, %s149
      %p151 = scmp.eq.s32.totalorder %s22, 0
      %p152 = por %p150, %p151
      %p153 = scmp.le.s32.totalorder 1, %s16
      %p154 = scmp.lt.s32.totalorder %s16, 3
      %p155 = pnand %p153, %p154
      %p156 = pneg %p155
      // Predicated region
      $region9: #{tpu_custom_call.1} parent=5 // pred_check
        _
      $region10: #{tpu_custom_call.1} parent=5 // pred_check_branch
        %158 = sbr.rel (%p155) target = $region12
      $region11: #{tpu_custom_call.1} parent=5 // pred_region
        %s159 = ssub.s32 %s16, 1
      $region12: #{tpu_custom_call.1} parent=5 // pred_fallthru
        _
      %p160 = scmp.lt.s32.totalorder %s16, 2
      // Predicated region
      $region13: #{tpu_custom_call.1} parent=5 // pred_check
        %p161 = pneg %p160
      $region14: #{tpu_custom_call.1} parent=5 // pred_check_branch
        %163 = sbr.rel (%p161) target = $region16
      $region15: #{tpu_custom_call.1} parent=5 // pred_region
        // Predicated region
        $region17: #{tpu_custom_call.1} parent=15 // pred_check
          %p164 = pneg %p57
        $region18: #{tpu_custom_call.1} parent=15 // pred_check_branch
          %166 = sbr.rel (%p164) target = $region20
        $region19: #{tpu_custom_call.1} parent=15 // pred_region
          %s167 = smul.u32 16, %s24
          %p168 = scmp.lt.s32.totalorder %s23, 1
          %s169 = scalar_select %p168, %s23, 1
          %p170 = scmp.lt.s32.totalorder %s167, 15
          %s171 = scalar_select %p170, %s167, 15
          %s172 = smul.addr %s169, 16
          %s173 = sadd.s32 %s171, %s172
          %s174 = smul.addr %s173, 8
          %s175 = scalar_lea.vmem %s0, %s174
          %s176 = smul.u32 16, %s24
        $region20: #{tpu_custom_call.1} parent=15 // pred_fallthru
          _
        // Predicated region
        $region21: #{tpu_custom_call.1} parent=15 // pred_check
          %p177 = pneg %p85
        $region22: #{tpu_custom_call.1} parent=15 // pred_check_branch
          %179 = sbr.rel (%p177) target = $region24
        $region23: #{tpu_custom_call.1} parent=15 // pred_region
          %p180 = scmp.lt.s32.totalorder %s23, 1
          %s181 = scalar_select %p180, %s23, 1
          %p182 = scmp.lt.s32.totalorder %s25, 0
          %s183 = scalar_select %p182, %s25, 0
          %s184 = sadd.s32 %s183, %s181
          %s185 = smul.addr %s184, 8
          %s186 = scalar_lea.vmem %s1, %s185
        $region24: #{tpu_custom_call.1} parent=15 // pred_fallthru
          _
      $region16: #{tpu_custom_call.1} parent=5 // pred_fallthru
        _
      %p187 = scmp.le.s32.totalorder 1, %s16
      %p188 = scmp.lt.s32.totalorder %s16, 3
      %p189 = pnand %p187, %p188
      %p190 = pneg %p189
      // Predicated region
      $region25: #{tpu_custom_call.1} parent=5 // pred_check
        _
      $region26: #{tpu_custom_call.1} parent=5 // pred_check_branch
        %192 = sbr.rel (%p189) target = $region28
      $region27: #{tpu_custom_call.1} parent=5 // pred_region
        %s193 = ssub.s32 %s16, 1
        %s194 = smul.u32 16, %s27
        %p195 = scmp.lt.s32.totalorder %s26, 1
        %s196 = scalar_select %p195, %s26, 1
        %p197 = scmp.lt.s32.totalorder %s194, 15
        %s198 = scalar_select %p197, %s194, 15
        %s199 = smul.addr %s196, 16
        %s200 = sadd.s32 %s198, %s199
        %s201 = smul.addr %s200, 8
        %s202 = scalar_lea.vmem %s0, %s201
        %p203 = pneg %p63
        %p204 = pneg %p60
        %p205 = scmp.lt.s32.totalorder %s26, 1
        %s206 = scalar_select %p205, %s26, 1
        %p207 = scmp.lt.s32.totalorder %s28, 0
        %s208 = scalar_select %p207, %s28, 0
        %s209 = sadd.s32 %s208, %s206
        %s210 = smul.addr %s209, 8
        %s211 = scalar_lea.vmem %s1, %s210
        %p212 = pneg %p91
        %p213 = pneg %p88
        %p214 = pneg %p119
        %p215 = pneg %p116
        %s216 = sand.u32 %s106, 1
        %s217 = scalar_lea.sflag [#allocation6], %s216
        %s218 = sand.u32 %s106, 1
        %s219 = scalar_lea.vmem [#allocation5], %s218
        %p220 = pneg %p145
        %p221 = pneg %p142
        %s222 = sand.u32 %s132, 1
        %s223 = scalar_lea.sflag [#allocation8], %s222
        %s224 = sand.u32 %s132, 1
        %s225 = scalar_lea.vmem [#allocation7], %s224
        %s226 = smul.u32 16, %s27
        %p227 = scmp.lt.s32.totalorder %s26, 1
        %s228 = scalar_select %p227, %s26, 1
        %p229 = scmp.lt.s32.totalorder %s226, 15
        %s230 = scalar_select %p229, %s226, 15
        %s231 = smul.addr %s228, 16
        %s232 = sadd.s32 %s230, %s231
        %s233 = smul.addr %s232, 8
        %s234 = scalar_lea.vmem %s0, %s233
        %s235 = smul.u32 16, %s27
        %p236 = scmp.lt.s32.totalorder %s26, 1
        %s237 = scalar_select %p236, %s26, 1
        %p238 = scmp.lt.s32.totalorder %s28, 0
        %s239 = scalar_select %p238, %s28, 0
        %s240 = sadd.s32 %s239, %s237
        %s241 = smul.addr %s240, 8
        %s242 = scalar_lea.vmem %s1, %s241
        %v243 = vld [vmem:[%s234] sm:$0xff]
        %v244 = vld [vmem:[%s234 + $0x8] sm:$0xff]
        %v245 = vld [vmem:[%s234 + $0x10] sm:$0xff]
        %v246 = vld [vmem:[%s234 + $0x18] sm:$0xff]
        %v247 = vld [vmem:[%s234 + $0x20] sm:$0xff]
        %v248 = vld [vmem:[%s234 + $0x28] sm:$0xff]
        %v249 = vld [vmem:[%s234 + $0x30] sm:$0xff]
        %v250 = vld [vmem:[%s234 + $0x38] sm:$0xff]
        %v251 = vld [vmem:[%s234 + $0x40] sm:$0xff]
        %v252 = vld [vmem:[%s234 + $0x48] sm:$0xff]
        %v253 = vld [vmem:[%s234 + $0x50] sm:$0xff]
        %v254 = vld [vmem:[%s234 + $0x58] sm:$0xff]
        %v255 = vld [vmem:[%s234 + $0x60] sm:$0xff]
        %v256 = vld [vmem:[%s234 + $0x68] sm:$0xff]
        %v257 = vld [vmem:[%s234 + $0x70] sm:$0xff]
        %v258 = vld [vmem:[%s234 + $0x78] sm:$0xff]
        %v259 = vld [vmem:[%s242] sm:$0xff]
        %vm260 = vcmask 64512
        %v262 = vsel %vm260, %v243, 0
        %v265 = vsel %vm260, %v244, 0
        %v268 = vsel %vm260, %v245, 0
        %v271 = vsel %vm260, %v246, 0
        %v274 = vsel %vm260, %v247, 0
        %v277 = vsel %vm260, %v248, 0
        %v280 = vsel %vm260, %v249, 0
        %v283 = vsel %vm260, %v250, 0
        %v286 = vsel %vm260, %v251, 0
        %v289 = vsel %vm260, %v252, 0
        %v292 = vsel %vm260, %v253, 0
        %v295 = vsel %vm260, %v254, 0
        %v298 = vsel %vm260, %v255, 0
        %v301 = vsel %vm260, %v256, 0
        %v304 = vsel %vm260, %v257, 0
        %v307 = vsel %vm260, %v258, 0
        %309 = vmatprep.subr.mxu0 0.0
        %310 = vmatpush1.msra.mxu0 %v259
        %311 = vmatprep.subr.mxu0 0.0
        %312 = vmatpush1.msra.mxu0 0.0
        %313 = vmatprep.subr.mxu0 0.0
        %314 = vmatpush1.msra.mxu0 0.0
        %315 = vmatprep.subr.mxu0 0.0
        %316 = vmatpush1.msra.mxu0 0.0
        %317 = vmatprep.subr.mxu0 0.0
        %318 = vmatpush1.msra.mxu0 0.0
        %319 = vmatprep.subr.mxu0 0.0
        %320 = vmatpush1.msra.mxu0 0.0
        %321 = vmatprep.subr.mxu0 0.0
        %322 = vmatpush1.msra.mxu0 0.0
        %323 = vmatprep.subr.mxu0 0.0
        %324 = vmatpush1.msra.mxu0 0.0
        %325 = vmatprep.subr.mxu0 0.0
        %326 = vmatpush1.msra.mxu0 0.0
        %327 = vmatprep.subr.mxu0 0.0
        %328 = vmatpush1.msra.mxu0 0.0
        %329 = vmatprep.subr.mxu0 0.0
        %330 = vmatpush1.msra.mxu0 0.0
        %331 = vmatprep.subr.mxu0 0.0
        %332 = vmatpush1.msra.mxu0 0.0
        %333 = vmatprep.subr.mxu0 0.0
        %334 = vmatpush1.msra.mxu0 0.0
        %335 = vmatprep.subr.mxu0 0.0
        %336 = vmatpush1.msra.mxu0 0.0
        %337 = vmatprep.subr.mxu0 0.0
        %338 = vmatpush1.msra.mxu0 0.0
        %339 = vmatprep.subr.mxu0 0.0
        %340 = vmatpush1.msra.mxu0 0.0
        %341 = vmatprep.subr.mxu0 0.0
        %342 = vmatpush1.msra.mxu0 0.0
        %343 = vmatprep.subr.mxu0 0.0
        %344 = vmatpush1.msra.mxu0 0.0
        %345 = vmatprep.subr.mxu0 0.0
        %346 = vmatpush1.msra.mxu0 0.0
        %347 = vmatprep.subr.mxu0 0.0
        %348 = vmatpush1.msra.mxu0 0.0
        %349 = vmatprep.subr.mxu0 0.0
        %350 = vmatpush1.msra.mxu0 0.0
        %351 = vmatprep.subr.mxu0 0.0
        %352 = vmatpush1.msra.mxu0 0.0
        %353 = vmatprep.subr.mxu0 0.0
        %354 = vmatpush1.msra.mxu0 0.0
        %355 = vmatprep.subr.mxu0 0.0
        %356 = vmatpush1.msra.mxu0 0.0
        %357 = vmatprep.subr.mxu0 0.0
        %358 = vmatpush1.msra.mxu0 0.0
        %359 = vmatprep.subr.mxu0 0.0
        %360 = vmatpush1.msra.mxu0 0.0
        %361 = vmatprep.subr.mxu0 0.0
        %362 = vmatpush1.msra.mxu0 0.0
        %363 = vmatprep.subr.mxu0 0.0
        %364 = vmatpush1.msra.mxu0 0.0
        %365 = vmatprep.subr.mxu0 0.0
        %366 = vmatpush1.msra.mxu0 0.0
        %367 = vmatprep.subr.mxu0 0.0
        %368 = vmatpush1.msra.mxu0 0.0
        %369 = vmatprep.subr.mxu0 0.0
        %370 = vmatpush1.msra.mxu0 0.0
        %371 = vmatprep.subr.mxu0 0.0
        %372 = vmatpush1.msra.mxu0 0.0
        %373 = vmatprep.mubr.f32.mxu0 0.0
        %374 = vmatmul.mubr.f32.gmra.mrb[0].mxu0 %v262
        %v375 = vpop.f32.mrb[0].mxu0
        %v376 = vadd.f32 0.0, %v375
        %v377 = vpop.f32.mrb[0].mxu0
        %378 = vmatprep.mubr.f32.mxu0 0.0
        %379 = vmatmul.mubr.f32.gmra.mrb[0].mxu0 %v265
        %v380 = vpop.f32.mrb[0].mxu0
        %v381 = vadd.f32 0.0, %v380
        %v382 = vpop.f32.mrb[0].mxu0
        %383 = vmatprep.mubr.f32.mxu0 0.0
        %384 = vmatmul.mubr.f32.gmra.mrb[0].mxu0 %v268
        %v385 = vpop.f32.mrb[0].mxu0
        %v386 = vadd.f32 0.0, %v385
        %v387 = vpop.f32.mrb[0].mxu0
        %388 = vmatprep.mubr.f32.mxu0 0.0
        %389 = vmatmul.mubr.f32.gmra.mrb[0].mxu0 %v271
        %v390 = vpop.f32.mrb[0].mxu0
        %v391 = vadd.f32 0.0, %v390
        %v392 = vpop.f32.mrb[0].mxu0
        %393 = vmatprep.mubr.f32.mxu0 0.0
        %394 = vmatmul.mubr.f32.gmra.mrb[0].mxu0 %v274
        %v395 = vpop.f32.mrb[0].mxu0
        %v396 = vadd.f32 0.0, %v395
        %v397 = vpop.f32.mrb[0].mxu0
        %398 = vmatprep.mubr.f32.mxu0 0.0
        %399 = vmatmul.mubr.f32.gmra.mrb[0].mxu0 %v277
        %v400 = vpop.f32.mrb[0].mxu0
        %v401 = vadd.f32 0.0, %v400
        %v402 = vpop.f32.mrb[0].mxu0
        %403 = vmatprep.mubr.f32.mxu0 0.0
        %404 = vmatmul.mubr.f32.gmra.mrb[0].mxu0 %v280
        %v405 = vpop.f32.mrb[0].mxu0
        %v406 = vadd.f32 0.0, %v405
        %v407 = vpop.f32.mrb[0].mxu0
        %408 = vmatprep.mubr.f32.mxu0 0.0
        %409 = vmatmul.mubr.f32.gmra.mrb[0].mxu0 %v283
        %v410 = vpop.f32.mrb[0].mxu0
        %v411 = vadd.f32 0.0, %v410
        %v412 = vpop.f32.mrb[0].mxu0
        %413 = vmatprep.mubr.f32.mxu0 0.0
        %414 = vmatmul.mubr.f32.gmra.mrb[0].mxu0 %v286
        %v415 = vpop.f32.mrb[0].mxu0
        %v416 = vadd.f32 0.0, %v415
        %v417 = vpop.f32.mrb[0].mxu0
        %418 = vmatprep.mubr.f32.mxu0 0.0
        %419 = vmatmul.mubr.f32.gmra.mrb[0].mxu0 %v289
        %v420 = vpop.f32.mrb[0].mxu0
        %v421 = vadd.f32 0.0, %v420
        %v422 = vpop.f32.mrb[0].mxu0
        %423 = vmatprep.mubr.f32.mxu0 0.0
        %424 = vmatmul.mubr.f32.gmra.mrb[0].mxu0 %v292
        %v425 = vpop.f32.mrb[0].mxu0
        %v426 = vadd.f32 0.0, %v425
        %v427 = vpop.f32.mrb[0].mxu0
        %428 = vmatprep.mubr.f32.mxu0 0.0
        %429 = vmatmul.mubr.f32.gmra.mrb[0].mxu0 %v295
        %v430 = vpop.f32.mrb[0].mxu0
        %v431 = vadd.f32 0.0, %v430
        %v432 = vpop.f32.mrb[0].mxu0
        %433 = vmatprep.mubr.f32.mxu0 0.0
        %434 = vmatmul.mubr.f32.gmra.mrb[0].mxu0 %v298
        %v435 = vpop.f32.mrb[0].mxu0
        %v436 = vadd.f32 0.0, %v435
        %v437 = vpop.f32.mrb[0].mxu0
        %438 = vmatprep.mubr.f32.mxu0 0.0
        %439 = vmatmul.mubr.f32.gmra.mrb[0].mxu0 %v301
        %v440 = vpop.f32.mrb[0].mxu0
        %v441 = vadd.f32 0.0, %v440
        %v442 = vpop.f32.mrb[0].mxu0
        %443 = vmatprep.mubr.f32.mxu0 0.0
        %444 = vmatmul.mubr.f32.gmra.mrb[0].mxu0 %v304
        %v445 = vpop.f32.mrb[0].mxu0
        %v446 = vadd.f32 0.0, %v445
        %v447 = vpop.f32.mrb[0].mxu0
        %448 = vmatprep.mubr.f32.mxu0 0.0
        %449 = vmatmul.mubr.f32.gmra.mrb[0].mxu0 %v307
        %v450 = vpop.f32.mrb[0].mxu0
        %v451 = vadd.f32 0.0, %v450
        %v452 = vpop.f32.mrb[0].mxu0
        %453 = vdwg.mxu0
        %454 = vmin.xlane.f32.xlu0 %v376
        %v455 = vpop.xlane.xlu0 %454
        %456 = vmin.xlane.f32.xlu0 %v381
        %v457 = vpop.xlane.xlu0 %456
        %458 = vmin.xlane.f32.xlu0 %v386
        %v459 = vpop.xlane.xlu0 %458
        %460 = vmin.xlane.f32.xlu0 %v391
        %v461 = vpop.xlane.xlu0 %460
        %462 = vmin.xlane.f32.xlu0 %v396
        %v463 = vpop.xlane.xlu0 %462
        %464 = vmin.xlane.f32.xlu0 %v401
        %v465 = vpop.xlane.xlu0 %464
        %466 = vmin.xlane.f32.xlu0 %v406
        %v467 = vpop.xlane.xlu0 %466
        %468 = vmin.xlane.f32.xlu0 %v411
        %v469 = vpop.xlane.xlu0 %468
        %470 = vmin.xlane.f32.xlu0 %v416
        %v471 = vpop.xlane.xlu0 %470
        %472 = vmin.xlane.f32.xlu0 %v421
        %v473 = vpop.xlane.xlu0 %472
        %474 = vmin.xlane.f32.xlu0 %v426
        %v475 = vpop.xlane.xlu0 %474
        %476 = vmin.xlane.f32.xlu0 %v431
        %v477 = vpop.xlane.xlu0 %476
        %478 = vmin.xlane.f32.xlu0 %v436
        %v479 = vpop.xlane.xlu0 %478
        %480 = vmin.xlane.f32.xlu0 %v441
        %v481 = vpop.xlane.xlu0 %480
        %482 = vmin.xlane.f32.xlu0 %v446
        %v483 = vpop.xlane.xlu0 %482
        %484 = vmin.xlane.f32.xlu0 %v451
        %v485 = vpop.xlane.xlu0 %484
        %p486 = scmp.eq.s32.totalorder %s28, 0
        // Predicated region
        $region29: #{tpu_custom_call.1} parent=27 // pred_check
          %p487 = pneg %p486
        $region30: #{tpu_custom_call.1} parent=27 // pred_check_branch
          %489 = sbr.rel (%p487) target = $region32
        $region31: #{tpu_custom_call.1} parent=27 // pred_region
          %vm490 = vcmask 7168
          %491 = vst.msk [vmem:[#allocation2] sm:$0xff] %vm490, %v455
          %492 = vst.msk [vmem:[#allocation2 + $0x8] sm:$0xff] %vm490, %v457
          %493 = vst.msk [vmem:[#allocation2 + $0x10] sm:$0xff] %vm490, %v459
          %494 = vst.msk [vmem:[#allocation2 + $0x18] sm:$0xff] %vm490, %v461
          %495 = vst.msk [vmem:[#allocation2 + $0x20] sm:$0xff] %vm490, %v463
          %496 = vst.msk [vmem:[#allocation2 + $0x28] sm:$0xff] %vm490, %v465
          %497 = vst.msk [vmem:[#allocation2 + $0x30] sm:$0xff] %vm490, %v467
          %498 = vst.msk [vmem:[#allocation2 + $0x38] sm:$0xff] %vm490, %v469
          %499 = vst.msk [vmem:[#allocation2 + $0x40] sm:$0xff] %vm490, %v471
          %500 = vst.msk [vmem:[#allocation2 + $0x48] sm:$0xff] %vm490, %v473
          %501 = vst.msk [vmem:[#allocation2 + $0x50] sm:$0xff] %vm490, %v475
          %502 = vst.msk [vmem:[#allocation2 + $0x58] sm:$0xff] %vm490, %v477
          %503 = vst.msk [vmem:[#allocation2 + $0x60] sm:$0xff] %vm490, %v479
          %504 = vst.msk [vmem:[#allocation2 + $0x68] sm:$0xff] %vm490, %v481
          %505 = vst.msk [vmem:[#allocation2 + $0x70] sm:$0xff] %vm490, %v483
          %506 = vst.msk [vmem:[#allocation2 + $0x78] sm:$0xff] %vm490, %v485
        $region32: #{tpu_custom_call.1} parent=27 // pred_fallthru
          _
        %p507 = scmp.ne.s32.totalorder %s28, 0
        // Predicated region
        $region33: #{tpu_custom_call.1} parent=27 // pred_check
          %p508 = pneg %p507
        $region34: #{tpu_custom_call.1} parent=27 // pred_check_branch
          %510 = sbr.rel (%p508) target = $region36
        $region35: #{tpu_custom_call.1} parent=27 // pred_region
          %v511 = vld [vmem:[#allocation2] sm:$0xff]
          %v512 = vld [vmem:[#allocation2 + $0x8] sm:$0xff]
          %v513 = vld [vmem:[#allocation2 + $0x10] sm:$0xff]
          %v514 = vld [vmem:[#allocation2 + $0x18] sm:$0xff]
          %v515 = vld [vmem:[#allocation2 + $0x20] sm:$0xff]
          %v516 = vld [vmem:[#allocation2 + $0x28] sm:$0xff]
          %v517 = vld [vmem:[#allocation2 + $0x30] sm:$0xff]
          %v518 = vld [vmem:[#allocation2 + $0x38] sm:$0xff]
          %v519 = vld [vmem:[#allocation2 + $0x40] sm:$0xff]
          %v520 = vld [vmem:[#allocation2 + $0x48] sm:$0xff]
          %v521 = vld [vmem:[#allocation2 + $0x50] sm:$0xff]
          %v522 = vld [vmem:[#allocation2 + $0x58] sm:$0xff]
          %v523 = vld [vmem:[#allocation2 + $0x60] sm:$0xff]
          %v524 = vld [vmem:[#allocation2 + $0x68] sm:$0xff]
          %v525 = vld [vmem:[#allocation2 + $0x70] sm:$0xff]
          %v526 = vld [vmem:[#allocation2 + $0x78] sm:$0xff]
          %v527 = vmin.f32 %v511, %v455
          %v528 = vmin.f32 %v512, %v457
          %v529 = vmin.f32 %v513, %v459
          %v530 = vmin.f32 %v514, %v461
          %v531 = vmin.f32 %v515, %v463
          %v532 = vmin.f32 %v516, %v465
          %v533 = vmin.f32 %v517, %v467
          %v534 = vmin.f32 %v518, %v469
          %v535 = vmin.f32 %v519, %v471
          %v536 = vmin.f32 %v520, %v473
          %v537 = vmin.f32 %v521, %v475
          %v538 = vmin.f32 %v522, %v477
          %v539 = vmin.f32 %v523, %v479
          %v540 = vmin.f32 %v524, %v481
          %v541 = vmin.f32 %v525, %v483
          %v542 = vmin.f32 %v526, %v485
          %vm543 = vcmask 7168
          %544 = vst.msk [vmem:[#allocation2] sm:$0xff] %vm543, %v527
          %545 = vst.msk [vmem:[#allocation2 + $0x8] sm:$0xff] %vm543, %v528
          %546 = vst.msk [vmem:[#allocation2 + $0x10] sm:$0xff] %vm543, %v529
          %547 = vst.msk [vmem:[#allocation2 + $0x18] sm:$0xff] %vm543, %v530
          %548 = vst.msk [vmem:[#allocation2 + $0x20] sm:$0xff] %vm543, %v531
          %549 = vst.msk [vmem:[#allocation2 + $0x28] sm:$0xff] %vm543, %v532
          %550 = vst.msk [vmem:[#allocation2 + $0x30] sm:$0xff] %vm543, %v533
          %551 = vst.msk [vmem:[#allocation2 + $0x38] sm:$0xff] %vm543, %v534
          %552 = vst.msk [vmem:[#allocation2 + $0x40] sm:$0xff] %vm543, %v535
          %553 = vst.msk [vmem:[#allocation2 + $0x48] sm:$0xff] %vm543, %v536
          %554 = vst.msk [vmem:[#allocation2 + $0x50] sm:$0xff] %vm543, %v537
          %555 = vst.msk [vmem:[#allocation2 + $0x58] sm:$0xff] %vm543, %v538
          %556 = vst.msk [vmem:[#allocation2 + $0x60] sm:$0xff] %vm543, %v539
          %557 = vst.msk [vmem:[#allocation2 + $0x68] sm:$0xff] %vm543, %v540
          %558 = vst.msk [vmem:[#allocation2 + $0x70] sm:$0xff] %vm543, %v541
          %559 = vst.msk [vmem:[#allocation2 + $0x78] sm:$0xff] %vm543, %v542
        $region36: #{tpu_custom_call.1} parent=27 // pred_fallthru
          _
        // Predicated region
        $region37: #{tpu_custom_call.1} parent=27 // pred_check
          %p560 = pneg %p486
        $region38: #{tpu_custom_call.1} parent=27 // pred_check_branch
          %562 = sbr.rel (%p560) target = $region40
        $region39: #{tpu_custom_call.1} parent=27 // pred_region
          %v563 = vld [vmem:[#allocation2] sm:$0xff]
          %v564 = vld [vmem:[#allocation2 + $0x8] sm:$0xff]
          %v565 = vld [vmem:[#allocation2 + $0x10] sm:$0xff]
          %v566 = vld [vmem:[#allocation2 + $0x18] sm:$0xff]
          %v567 = vld [vmem:[#allocation2 + $0x20] sm:$0xff]
          %v568 = vld [vmem:[#allocation2 + $0x28] sm:$0xff]
          %v569 = vld [vmem:[#allocation2 + $0x30] sm:$0xff]
          %v570 = vld [vmem:[#allocation2 + $0x38] sm:$0xff]
          %v571 = vld [vmem:[#allocation2 + $0x40] sm:$0xff]
          %v572 = vld [vmem:[#allocation2 + $0x48] sm:$0xff]
          %v573 = vld [vmem:[#allocation2 + $0x50] sm:$0xff]
          %v574 = vld [vmem:[#allocation2 + $0x58] sm:$0xff]
          %v575 = vld [vmem:[#allocation2 + $0x60] sm:$0xff]
          %v576 = vld [vmem:[#allocation2 + $0x68] sm:$0xff]
          %v577 = vld [vmem:[#allocation2 + $0x70] sm:$0xff]
          %v578 = vld [vmem:[#allocation2 + $0x78] sm:$0xff]
          %v579 = vmax.f32 %v563, 0.0
          %v580 = vmax.f32 %v564, 0.0
          %v581 = vmax.f32 %v565, 0.0
          %v582 = vmax.f32 %v566, 0.0
          %v583 = vmax.f32 %v567, 0.0
          %v584 = vmax.f32 %v568, 0.0
          %v585 = vmax.f32 %v569, 0.0
          %v586 = vmax.f32 %v570, 0.0
          %v587 = vmax.f32 %v571, 0.0
          %v588 = vmax.f32 %v572, 0.0
          %v589 = vmax.f32 %v573, 0.0
          %v590 = vmax.f32 %v574, 0.0
          %v591 = vmax.f32 %v575, 0.0
          %v592 = vmax.f32 %v576, 0.0
          %v593 = vmax.f32 %v577, 0.0
          %v594 = vmax.f32 %v578, 0.0
          %611 = vrot.lane.b32.xlu0 %v579, 5
          %v612 = vpop.permute.xlu0 %611
          %613 = vrot.lane.b32.xlu0 %v580, 5
          %v614 = vpop.permute.xlu0 %613
          %615 = vrot.lane.b32.xlu0 %v581, 5
          %v616 = vpop.permute.xlu0 %615
          %617 = vrot.lane.b32.xlu0 %v582, 5
          %v618 = vpop.permute.xlu0 %617
          %619 = vrot.lane.b32.xlu0 %v583, 5
          %v620 = vpop.permute.xlu0 %619
          %621 = vrot.lane.b32.xlu0 %v584, 5
          %v622 = vpop.permute.xlu0 %621
          %623 = vrot.lane.b32.xlu0 %v585, 5
          %v624 = vpop.permute.xlu0 %623
          %625 = vrot.lane.b32.xlu0 %v586, 5
          %v626 = vpop.permute.xlu0 %625
          %627 = vrot.lane.b32.xlu0 %v587, 5
          %v628 = vpop.permute.xlu0 %627
          %629 = vrot.lane.b32.xlu0 %v588, 5
          %v630 = vpop.permute.xlu0 %629
          %631 = vrot.lane.b32.xlu0 %v589, 5
          %v632 = vpop.permute.xlu0 %631
          %633 = vrot.lane.b32.xlu0 %v590, 5
          %v634 = vpop.permute.xlu0 %633
          %635 = vrot.lane.b32.xlu0 %v591, 5
          %v636 = vpop.permute.xlu0 %635
          %637 = vrot.lane.b32.xlu0 %v592, 5
          %v638 = vpop.permute.xlu0 %637
          %639 = vrot.lane.b32.xlu0 %v593, 5
          %v640 = vpop.permute.xlu0 %639
          %641 = vrot.lane.b32.xlu0 %v594, 5
          %v642 = vpop.permute.xlu0 %641
          %v659 = vmul.f32 %v243, %v612
          %v660 = vmul.f32 %v244, %v614
          %v661 = vmul.f32 %v245, %v616
          %v662 = vmul.f32 %v246, %v618
          %v663 = vmul.f32 %v247, %v620
          %v664 = vmul.f32 %v248, %v622
          %v665 = vmul.f32 %v249, %v624
          %v666 = vmul.f32 %v250, %v626
          %v667 = vmul.f32 %v251, %v628
          %v668 = vmul.f32 %v252, %v630
          %v669 = vmul.f32 %v253, %v632
          %v670 = vmul.f32 %v254, %v634
          %v671 = vmul.f32 %v255, %v636
          %v672 = vmul.f32 %v256, %v638
          %v673 = vmul.f32 %v257, %v640
          %v674 = vmul.f32 %v258, %v642
          %691 = vrot.lane.b32.xlu0 %v659, 123
          %v692 = vpop.permute.xlu0 %691
          %693 = vrot.lane.b32.xlu0 %v660, 123
          %v694 = vpop.permute.xlu0 %693
          %695 = vrot.lane.b32.xlu0 %v661, 123
          %v696 = vpop.permute.xlu0 %695
          %697 = vrot.lane.b32.xlu0 %v662, 123
          %v698 = vpop.permute.xlu0 %697
          %699 = vrot.lane.b32.xlu0 %v663, 123
          %v700 = vpop.permute.xlu0 %699
          %701 = vrot.lane.b32.xlu0 %v664, 123
          %v702 = vpop.permute.xlu0 %701
          %703 = vrot.lane.b32.xlu0 %v665, 123
          %v704 = vpop.permute.xlu0 %703
          %705 = vrot.lane.b32.xlu0 %v666, 123
          %v706 = vpop.permute.xlu0 %705
          %707 = vrot.lane.b32.xlu0 %v667, 123
          %v708 = vpop.permute.xlu0 %707
          %709 = vrot.lane.b32.xlu0 %v668, 123
          %v710 = vpop.permute.xlu0 %709
          %711 = vrot.lane.b32.xlu0 %v669, 123
          %v712 = vpop.permute.xlu0 %711
          %713 = vrot.lane.b32.xlu0 %v670, 123
          %v714 = vpop.permute.xlu0 %713
          %715 = vrot.lane.b32.xlu0 %v671, 123
          %v716 = vpop.permute.xlu0 %715
          %717 = vrot.lane.b32.xlu0 %v672, 123
          %v718 = vpop.permute.xlu0 %717
          %719 = vrot.lane.b32.xlu0 %v673, 123
          %v720 = vpop.permute.xlu0 %719
          %721 = vrot.lane.b32.xlu0 %v674, 123
          %v722 = vpop.permute.xlu0 %721
          %739 = vxpose.xlu0.b32.start [1/16] %v692, 128
          %740 = vxpose.xlu0.b32.cont [2/16] %v694, 128
          %741 = vxpose.xlu0.b32.cont [3/16] %v696, 128
          %742 = vxpose.xlu0.b32.cont [4/16] %v698, 128
          %743 = vxpose.xlu0.b32.cont [5/16] %v700, 128
          %744 = vxpose.xlu0.b32.cont [6/16] %v702, 128
          %745 = vxpose.xlu0.b32.cont [7/16] %v704, 128
          %746 = vxpose.xlu0.b32.cont [8/16] %v706, 128
          %747 = vxpose.xlu0.b32.cont [9/16] %v708, 128
          %748 = vxpose.xlu0.b32.cont [10/16] %v710, 128
          %749 = vxpose.xlu0.b32.cont [11/16] %v712, 128
          %750 = vxpose.xlu0.b32.cont [12/16] %v714, 128
          %751 = vxpose.xlu0.b32.cont [13/16] %v716, 128
          %752 = vxpose.xlu0.b32.cont [14/16] %v718, 128
          %753 = vxpose.xlu0.b32.cont [15/16] %v720, 128
          %754 = vxpose.xlu0.b32.end [16/16] %v722, 128
          %v755 = vpop.trf.xlu0
          %v756 = vpop.trf.xlu0
          %v757 = vpop.trf.xlu0
          %v758 = vpop.trf.xlu0
          %v759 = vpop.trf.xlu0
          %v760 = vpop.trf.xlu0
          %v761 = vpop.trf.xlu0
          %v762 = vpop.trf.xlu0
          %v763 = vpop.trf.xlu0
          %v764 = vpop.trf.xlu0
          %v765 = vpop.trf.xlu0
          %v766 = vpop.trf.xlu0
          %v767 = vpop.trf.xlu0
          %v768 = vpop.trf.xlu0
          %v769 = vpop.trf.xlu0
          %v770 = vpop.trf.xlu0
          %771 = vst [vmem:[%s219] sm:$0x1] %v755
        $region40: #{tpu_custom_call.1} parent=27 // pred_fallthru
          _
        %v772 = vmin.f32 %v376, %v396
        %v773 = vmin.f32 %v381, %v401
        %v774 = vmin.f32 %v386, %v406
        %v775 = vmin.f32 %v391, %v411
        %v776 = vmin.f32 %v772, %v416
        %v777 = vmin.f32 %v773, %v421
        %v778 = vmin.f32 %v774, %v426
        %v779 = vmin.f32 %v775, %v431
        %v780 = vmin.f32 %v776, %v436
        %v781 = vmin.f32 %v777, %v441
        %v782 = vmin.f32 %v778, %v446
        %v783 = vmin.f32 %v779, %v451
        %v784 = vmin.f32 %v780, %v781
        %v785 = vmin.f32 %v782, %v783
        %v786 = vmin.f32 %v784, %v785
        %v787 = vrot.slane %v786, 4
        %v788 = vmin.f32 %v786, %v787
        %v789 = vrot.slane %v788, 2
        %v790 = vmin.f32 %v788, %v789
        %v791 = vrot.slane %v790, 1
        %v792 = vmin.f32 %v790, %v791
        %vm793 = vcmp.eq.f32.partialorder %v376, %v792
        %vm794 = vcmp.eq.f32.partialorder %v381, %v792
        %vm795 = vcmp.eq.f32.partialorder %v386, %v792
        %vm796 = vcmp.eq.f32.partialorder %v391, %v792
        %vm797 = vcmp.eq.f32.partialorder %v396, %v792
        %vm798 = vcmp.eq.f32.partialorder %v401, %v792
        %vm799 = vcmp.eq.f32.partialorder %v406, %v792
        %vm800 = vcmp.eq.f32.partialorder %v411, %v792
        %vm801 = vcmp.eq.f32.partialorder %v416, %v792
        %vm802 = vcmp.eq.f32.partialorder %v421, %v792
        %vm803 = vcmp.eq.f32.partialorder %v426, %v792
        %vm804 = vcmp.eq.f32.partialorder %v431, %v792
        %vm805 = vcmp.eq.f32.partialorder %v436, %v792
        %vm806 = vcmp.eq.f32.partialorder %v441, %v792
        %vm807 = vcmp.eq.f32.partialorder %v446, %v792
        %vm808 = vcmp.eq.f32.partialorder %v451, %v792
        %809 = vset.pattern.permute.xlu0 5
        %810 = vperm.xlu0 %809, %v243
        %v811 = vpop.permute.xlu0 %810
        %813 = vset.pattern.permute.xlu0 5
        %814 = vperm.xlu0 %813, %v244
        %v815 = vpop.permute.xlu0 %814
        %817 = vset.pattern.permute.xlu0 5
        %818 = vperm.xlu0 %817, %v245
        %v819 = vpop.permute.xlu0 %818
        %821 = vset.pattern.permute.xlu0 5
        %822 = vperm.xlu0 %821, %v246
        %v823 = vpop.permute.xlu0 %822
        %825 = vset.pattern.permute.xlu0 5
        %826 = vperm.xlu0 %825, %v247
        %v827 = vpop.permute.xlu0 %826
        %829 = vset.pattern.permute.xlu0 5
        %830 = vperm.xlu0 %829, %v248
        %v831 = vpop.permute.xlu0 %830
        %833 = vset.pattern.permute.xlu0 5
        %834 = vperm.xlu0 %833, %v249
        %v835 = vpop.permute.xlu0 %834
        %837 = vset.pattern.permute.xlu0 5
        %838 = vperm.xlu0 %837, %v250
        %v839 = vpop.permute.xlu0 %838
        %841 = vset.pattern.permute.xlu0 5
        %842 = vperm.xlu0 %841, %v251
        %v843 = vpop.permute.xlu0 %842
        %845 = vset.pattern.permute.xlu0 5
        %846 = vperm.xlu0 %845, %v252
        %v847 = vpop.permute.xlu0 %846
        %849 = vset.pattern.permute.xlu0 5
        %850 = vperm.xlu0 %849, %v253
        %v851 = vpop.permute.xlu0 %850
        %853 = vset.pattern.permute.xlu0 5
        %854 = vperm.xlu0 %853, %v254
        %v855 = vpop.permute.xlu0 %854
        %857 = vset.pattern.permute.xlu0 5
        %858 = vperm.xlu0 %857, %v255
        %v859 = vpop.permute.xlu0 %858
        %861 = vset.pattern.permute.xlu0 5
        %862 = vperm.xlu0 %861, %v256
        %v863 = vpop.permute.xlu0 %862
        %865 = vset.pattern.permute.xlu0 5
        %866 = vperm.xlu0 %865, %v257
        %v867 = vpop.permute.xlu0 %866
        %869 = vset.pattern.permute.xlu0 5
        %870 = vperm.xlu0 %869, %v258
        %v871 = vpop.permute.xlu0 %870
        %v873 = vsel %vm793, %v811, -inf
        %v874 = vsel %vm794, %v815, -inf
        %v875 = vsel %vm795, %v819, -inf
        %v876 = vsel %vm796, %v823, -inf
        %v877 = vsel %vm797, %v827, -inf
        %v878 = vsel %vm798, %v831, -inf
        %v879 = vsel %vm799, %v835, -inf
        %v880 = vsel %vm800, %v839, -inf
        %v881 = vsel %vm801, %v843, -inf
        %v882 = vsel %vm802, %v847, -inf
        %v883 = vsel %vm803, %v851, -inf
        %v884 = vsel %vm804, %v855, -inf
        %v885 = vsel %vm805, %v859, -inf
        %v886 = vsel %vm806, %v863, -inf
        %v887 = vsel %vm807, %v867, -inf
        %v888 = vsel %vm808, %v871, -inf
        %v889 = vmax.f32 %v873, %v877
        %v890 = vmax.f32 %v874, %v878
        %v891 = vmax.f32 %v875, %v879
        %v892 = vmax.f32 %v876, %v880
        %v893 = vmax.f32 %v889, %v881
        %v894 = vmax.f32 %v890, %v882
        %v895 = vmax.f32 %v891, %v883
        %v896 = vmax.f32 %v892, %v884
        %v897 = vmax.f32 %v893, %v885
        %v898 = vmax.f32 %v894, %v886
        %v899 = vmax.f32 %v895, %v887
        %v900 = vmax.f32 %v896, %v888
        %v901 = vmax.f32 %v897, %v898
        %v902 = vmax.f32 %v899, %v900
        %v903 = vmax.f32 %v901, %v902
        %v904 = vrot.slane %v903, 4
        %v905 = vmax.f32 %v903, %v904
        %v906 = vrot.slane %v905, 2
        %v907 = vmax.f32 %v905, %v906
        %v908 = vrot.slane %v907, 1
        %v909 = vmax.f32 %v907, %v908
        %s910 = smul.u32 %s28, 128
        %p911 = scmp.eq.s32.totalorder %s27, 0
        // Predicated region
        $region41: #{tpu_custom_call.1} parent=27 // pred_check
          %p912 = pneg %p911
        $region42: #{tpu_custom_call.1} parent=27 // pred_check_branch
          %914 = sbr.rel (%p912) target = $region44
        $region43: #{tpu_custom_call.1} parent=27 // pred_region
          %s915 = sshra.s32 %s910, 7
          %s916 = sand.u32 %s910, 127
          %s917 = scalar_lea.vmem [#allocation3], %s915
          %918 = vst [vmem:[%s917] sm:$0x1] %v792
          %s919 = scalar_lea.vmem [#allocation4], %s915
          %920 = vst [vmem:[%s919] sm:$0x1] %v909
        $region44: #{tpu_custom_call.1} parent=27 // pred_fallthru
          _
        %p921 = scmp.ne.s32.totalorder %s27, 0
        // Predicated region
        $region45: #{tpu_custom_call.1} parent=27 // pred_check
          %p922 = pneg %p921
        $region46: #{tpu_custom_call.1} parent=27 // pred_check_branch
          %924 = sbr.rel (%p922) target = $region48
        $region47: #{tpu_custom_call.1} parent=27 // pred_region
          %s925 = sshra.s32 %s910, 7
          %s926 = sand.u32 %s910, 127
          %s927 = scalar_lea.vmem [#allocation3], %s925
          %v928 = vld [vmem:[%s927] sm:$0x1]
          %s929 = scalar_lea.vmem [#allocation4], %s925
          %v930 = vld [vmem:[%s929] sm:$0x1]
          %vm931 = vcmp.lt.f32.partialorder %v792, %v928
          %v932 = vsel %vm931, %v792, %v928
          %933 = vst [vmem:[%s927] sm:$0x1] %v932
          %v934 = vsel %vm931, %v909, %v930
          %935 = vst [vmem:[%s929] sm:$0x1] %v934
        $region48: #{tpu_custom_call.1} parent=27 // pred_fallthru
          _
        %p936 = pnand %p911, %p486
        %p937 = pneg %p936
        // Predicated region
        $region49: #{tpu_custom_call.1} parent=27 // pred_check
          _
        $region50: #{tpu_custom_call.1} parent=27 // pred_check_branch
          %939 = sbr.rel (%p936) target = $region52
        $region51: #{tpu_custom_call.1} parent=27 // pred_region
          %v940 = vld [vmem:[#allocation4] sm:$0x1]
          %v941 = vld [vmem:[#allocation3] sm:$0x1]
          %v942 = vmax.f32 %v941, 0.0
          %v943 = vmul.f32 %v940, %v942
          %944 = vst [vmem:[%s225] sm:$0x1] %v943
        $region52: #{tpu_custom_call.1} parent=27 // pred_fallthru
          _
        %s945 = sand.u32 %s106, 1
        %s946 = scalar_lea.sflag [#allocation6], %s945
        %s947 = sand.u32 %s106, 1
        %s948 = scalar_lea.vmem [#allocation5], %s947
        %s949 = sand.u32 %s132, 1
        %s950 = scalar_lea.sflag [#allocation8], %s949
        %s951 = sand.u32 %s132, 1
        %s952 = scalar_lea.vmem [#allocation7], %s951
        // Predicated region
        $region53: #{tpu_custom_call.1} parent=27 // pred_check
          %p953 = pneg %p116
        $region54: #{tpu_custom_call.1} parent=27 // pred_check_branch
          %955 = sbr.rel (%p953) target = $region56
        $region55: #{tpu_custom_call.1} parent=27 // pred_region
          %s957 = ssub.s32 16, 16
          %958 = vsyncadd %s946, %s957
          %s959 = sadd.s32 %s27, %s26
          %s960 = smul.addr %s959, 16
          %s961 = scalar_lea.hbm %s2, %s960
          %s963 = sshll.u32 %s948, 4
          %s964 = int_to_ptr.vmem [resolvable:$true] %s963
          %966 = dma.vmem_to_hbm [thread:$0]  %s964, 16, %s961, %s946
        $region56: #{tpu_custom_call.1} parent=27 // pred_fallthru
          _
        // Predicated region
        $region57: #{tpu_custom_call.1} parent=27 // pred_check
          %p967 = pneg %p142
        $region58: #{tpu_custom_call.1} parent=27 // pred_check_branch
          %969 = sbr.rel (%p967) target = $region60
        $region59: #{tpu_custom_call.1} parent=27 // pred_region
          %s971 = ssub.s32 16, 16
          %972 = vsyncadd %s950, %s971
          %s973 = smul.addr %s26, 16
          %s974 = scalar_lea.hbm %s3, %s973
          %s976 = sshll.u32 %s952, 4
          %s977 = int_to_ptr.vmem [resolvable:$true] %s976
          %979 = dma.vmem_to_hbm [thread:$0]  %s977, 16, %s974, %s950
        $region60: #{tpu_custom_call.1} parent=27 // pred_fallthru
          _
      $region28: #{tpu_custom_call.1} parent=5 // pred_fallthru
        _
      %p980 = scmp.le.s32.totalorder 2, %s16
      // Predicated region
      $region61: #{tpu_custom_call.1} parent=5 // pred_check
        %p981 = pneg %p980
      $region62: #{tpu_custom_call.1} parent=5 // pred_check_branch
        %983 = sbr.rel (%p981) target = $region64
      $region63: #{tpu_custom_call.1} parent=5 // pred_region
        %s984 = ssub.s32 %s16, 2
        // Predicated region
        $region65: #{tpu_custom_call.1} parent=63 // pred_check
          %p985 = pneg %p122
        $region66: #{tpu_custom_call.1} parent=63 // pred_check_branch
          %987 = sbr.rel (%p985) target = $region68
        $region67: #{tpu_custom_call.1} parent=63 // pred_region
          %s988 = sand.u32 %s107, 1
          %s989 = scalar_lea.sflag [#allocation6], %s988
          %s990 = sand.u32 %s107, 1
          %s991 = scalar_lea.vmem [#allocation5], %s990
          %992 = dma.done %s989, 16
        $region68: #{tpu_custom_call.1} parent=63 // pred_fallthru
          _
        // Predicated region
        $region69: #{tpu_custom_call.1} parent=63 // pred_check
          %p993 = pneg %p148
        $region70: #{tpu_custom_call.1} parent=63 // pred_check_branch
          %995 = sbr.rel (%p993) target = $region72
        $region71: #{tpu_custom_call.1} parent=63 // pred_region
          %s996 = sand.u32 %s133, 1
          %s997 = scalar_lea.sflag [#allocation8], %s996
          %s998 = sand.u32 %s133, 1
          %s999 = scalar_lea.vmem [#allocation7], %s998
          %1000 = dma.done %s997, 16
        $region72: #{tpu_custom_call.1} parent=63 // pred_fallthru
          _
      $region64: #{tpu_custom_call.1} parent=5 // pred_fallthru
        _
    $region6: #{tpu_custom_call.1} parent=1 // loop_footer
      %s20 = sadd.s32 1, %s16
    $region7: #{tpu_custom_call.1} parent=1 // loop_footer_branch
      %15 = sbr.rel target = $region3
    $region8: #{tpu_custom_call.1} parent=1 // loop_exit
      _
    %1001 = vsyncpa [#allocation6], 1
    %s1002 = scalar_lea.sflag [#allocation6], 1
    %1003 = vsyncpa %s1002, 1
    %1004 = vsyncpa [#allocation8], 1
    %s1005 = scalar_lea.sflag [#allocation8], 1
    %1006 = vsyncpa %s1005, 1

</llo_original>
